<compile_context>
chip_gen: v7x
topology: tpu7x:2x2x1
jax: 0.10.0
libtpu: 0.0.40
codegen_flags: <defaults>
</compile_context>

<pallas_src>
import functools
import math

import jax
import jax.numpy as jnp
import numpy as np
from jax import lax
from jax.experimental import pallas as pl
from jax.experimental.pallas import tpu as pltpu


def _gelu_exact(x):
    # PyTorch nn.GELU() default = exact erf-based GELU.
    return 0.5 * x * (1.0 + lax.erf(x * (1.0 / math.sqrt(2.0))))


def _layer_norm(v, w, b, eps=1e-5):
    v = v.astype(jnp.float32)
    mu = jnp.mean(v, axis=-1, keepdims=True)
    var = jnp.mean(jnp.square(v - mu), axis=-1, keepdims=True)
    return (v - mu) * lax.rsqrt(var + eps) * w + b


def _largest_divisor_leq(n, cap):
    cap = max(1, min(n, cap))
    for d in range(cap, 0, -1):
        if n % d == 0:
            return d
    return n


# ---------------------------------------------------------------------------
# Pass 1: accumulate kE = (LN1(x)Wk + bk)^T @ E  (D, K)   and
#                    vF = F^T @ (LN1(x)Wv + bv)  (K, D)
# over L-tiles.  grid = (B, L_tiles); reduction lives in f32 VMEM scratch and
# is emitted as bf16 (scale folded into kE) on the last L-tile.
# ---------------------------------------------------------------------------
def kv_proj_kernel(x_ref, ln1_w_ref, ln1_b_ref,
                   wk_ref, bk_ref, wv_ref, bv_ref,
                   E_ref, F_ref,
                   kE_ref, vF_ref,
                   kE_acc, vF_acc, *, scale):
    lt = pl.program_id(1)
    tile_l = x_ref.shape[1]

    @pl.when(lt == 0)
    def _init():
        kE_acc[...] = jnp.zeros_like(kE_acc)
        vF_acc[...] = jnp.zeros_like(vF_acc)

    x = x_ref[0].astype(jnp.float32)                           # (tL, D)
    h = _layer_norm(x, ln1_w_ref[...], ln1_b_ref[...]).astype(jnp.bfloat16)

    k = (jnp.dot(h, wk_ref[...], preferred_element_type=jnp.float32)
         + bk_ref[...]).astype(jnp.bfloat16)                   # (tL, D)
    v = (jnp.dot(h, wv_ref[...], preferred_element_type=jnp.float32)
         + bv_ref[...]).astype(jnp.bfloat16)                   # (tL, D)

    off = pl.multiple_of(lt * tile_l, tile_l)
    e = E_ref[pl.ds(off, tile_l), :]                           # (tL, K) bf16
    f = F_ref[pl.ds(off, tile_l), :]                           # (tL, K) bf16

    # kE_acc += k^T @ E_tile  -> (D, K)
    kE_acc[...] += lax.dot_general(k, e, (((0,), (0,)), ((), ())),
                                   preferred_element_type=jnp.float32)
    # vF_acc += F_tile^T @ v  -> (K, D)
    vF_acc[...] += lax.dot_general(f, v, (((0,), (0,)), ((), ())),
                                   preferred_element_type=jnp.float32)

    @pl.when(lt == pl.num_programs(1) - 1)
    def _finalize():
        # Fold the 1/sqrt(dh) attention scale into kE once; emit bf16.
        kE_ref[0] = (kE_acc[...] * scale).astype(kE_ref.dtype)
        vF_ref[0] = vF_acc[...].astype(vF_ref.dtype)


# ---------------------------------------------------------------------------
# Pass 2: per (batch, L-tile): LN1 -> Q -> fused per-head Linformer attention
# (using kE/vF) -> Wo -> residual -> LN2 -> chunked MLP -> residual.
# ---------------------------------------------------------------------------
def attn_mlp_kernel(x_ref, kE_ref, vF_ref,
                    ln1_w_ref, ln1_b_ref, wq_ref, bq_ref, wo_ref, bo_ref,
                    ln2_w_ref, ln2_b_ref, w1_ref, b1_ref, w2_ref, b2_ref,
                    out_ref, ho_scr, *, n_heads, mlp_chunk):
    x = x_ref[0]                                               # (tL, D) f32
    tL, D = x.shape
    dh = D // n_heads

    h = _layer_norm(x, ln1_w_ref[...], ln1_b_ref[...])
    qb = (jnp.dot(h.astype(jnp.bfloat16), wq_ref[...],
                  preferred_element_type=jnp.float32)
          + bq_ref[...]).astype(jnp.bfloat16)                  # (tL, D)

    kE = kE_ref[0]                                             # (D, K) bf16, pre-scaled
    vF = vF_ref[0]                                             # (K, D) bf16

    # Fused per-head: scores -> softmax -> attn @ vF_head (no (H*tL, K) scratch).
    for hi in range(n_heads):
        cs = slice(hi * dh, (hi + 1) * dh)
        s = jnp.dot(qb[:, cs], kE[cs, :],
                    preferred_element_type=jnp.float32)        # (tL, K)
        s = s - jnp.max(s, axis=-1, keepdims=True)
        p = jnp.exp(s)
        inv = pl.reciprocal(jnp.sum(p, axis=-1, keepdims=True), approx=True)
        attn = (p * inv).astype(jnp.bfloat16)
        ho = jnp.dot(attn, vF[:, cs], preferred_element_type=jnp.float32)
        ho_scr[:, cs] = ho.astype(jnp.bfloat16)

    attn_out = jnp.dot(ho_scr[...], wo_ref[...],
                       preferred_element_type=jnp.float32) + bo_ref[...]
    x1 = x + attn_out

    # MLP with chunked hidden dimension (bounds (tL, mlp_dim) temporaries).
    h2 = _layer_norm(x1, ln2_w_ref[...], ln2_b_ref[...]).astype(jnp.bfloat16)
    M = w1_ref.shape[1]
    n_chunks = M // mlp_chunk

    if n_chunks == 1:
        f1 = (jnp.dot(h2, w1_ref[...], preferred_element_type=jnp.float32)
              + b1_ref[...])
        g = _gelu_exact(f1).astype(jnp.bfloat16)
        f2 = jnp.dot(g, w2_ref[...], preferred_element_type=jnp.float32)
    else:
        def body(c, acc):
            off = pl.multiple_of(c * mlp_chunk, mlp_chunk)
            f1c = (jnp.dot(h2, w1_ref[:, pl.ds(off, mlp_chunk)],
                           preferred_element_type=jnp.float32)
                   + b1_ref[:, pl.ds(off, mlp_chunk)])
            gc = _gelu_exact(f1c).astype(jnp.bfloat16)
            return acc + jnp.dot(gc, w2_ref[pl.ds(off, mlp_chunk), :],
                                 preferred_element_type=jnp.float32)
        f2 = lax.fori_loop(0, n_chunks, body, jnp.zeros((tL, D), jnp.float32))

    out_ref[0] = (x1 + f2 + b2_ref[...]).astype(out_ref.dtype)


# ---------------------------------------------------------------------------
# Wrapper
# ---------------------------------------------------------------------------
def transformer_block(x, params, n_heads, tile_l=None):
    B, L, D = x.shape
    K = params["E"].shape[1]
    M = params["w1"].shape[1]
    assert D % n_heads == 0
    assert params["E"].shape[0] == L, "kernel assumes E/F first dim == seq_len"
    dh = D // n_heads
    scale = dh ** (-0.5)

    # Generation-aware sizing from the chip's actual VMEM capacity.
    try:
        _cap = int(pltpu.get_tpu_info().vmem_capacity_bytes)
    except Exception:
        _cap = 0
    small_vmem = bool(_cap) and _cap <= (64 << 20)             # v7x-class
    vmem_limit = max(32 << 20, int(_cap * 0.85)) if _cap else None

    if tile_l is None:
        tile_l = _largest_divisor_leq(L, 256 if small_vmem else 512)
    assert L % tile_l == 0
    T = L // tile_l
    mlp_chunk = _largest_divisor_leq(M, 1024 if small_vmem else 2048)

    bf16 = jnp.bfloat16
    x_bf = x.astype(bf16)                # pass-1 only reads x for LN1 -> K/V
    wq_b = params["wq"].astype(bf16)
    wk_b = params["wk"].astype(bf16)
    wv_b = params["wv"].astype(bf16)
    wo_b = params["wo"].astype(bf16)
    w1_b = params["w1"].astype(bf16)
    w2_b = params["w2"].astype(bf16)
    E_b = params["E"].astype(bf16)
    F_b = params["F"].astype(bf16)

    def const_spec(arr):
        nd = arr.ndim
        # Constant block index + single buffering: no duplicate weight copies.
        return pl.BlockSpec(arr.shape, lambda b, t, _nd=nd: (0,) * _nd,
                            pipeline_mode=pl.Buffered(1))

    def cp(semantics):
        kw = dict(dimension_semantics=semantics)
        if vmem_limit is not None:
            kw["vmem_limit_bytes"] = int(vmem_limit)
        return pltpu.CompilerParams(**kw)

    # ---- pass 1: kE / vF accumulation over L tiles --------------------------
    kE, vF = pl.pallas_call(
        functools.partial(kv_proj_kernel, scale=scale),
        out_shape=(jax.ShapeDtypeStruct((B, D, K), bf16),
                   jax.ShapeDtypeStruct((B, K, D), bf16)),
        grid=(B, T),
        in_specs=[
            pl.BlockSpec((1, tile_l, D), lambda b, t: (b, t, 0)),
            const_spec(params["ln1_w"]), const_spec(params["ln1_b"]),
            const_spec(wk_b), const_spec(params["bk"]),
            const_spec(wv_b), const_spec(params["bv"]),
            const_spec(E_b), const_spec(F_b),
        ],
        out_specs=(pl.BlockSpec((1, D, K), lambda b, t: (b, 0, 0)),
                   pl.BlockSpec((1, K, D), lambda b, t: (b, 0, 0))),
        scratch_shapes=[pltpu.VMEM((D, K), jnp.float32),
                        pltpu.VMEM((K, D), jnp.float32)],
        compiler_params=cp(("parallel", "arbitrary")),
    )(x_bf, params["ln1_w"], params["ln1_b"], wk_b, params["bk"],
      wv_b, params["bv"], E_b, F_b)

    # ---- pass 2: fused attention + MLP per L tile ----------------------------
    out = pl.pallas_call(
        functools.partial(attn_mlp_kernel, n_heads=n_heads, mlp_chunk=mlp_chunk),
        out_shape=jax.ShapeDtypeStruct((B, L, D), x.dtype),
        grid=(B, T),
        in_specs=[
            pl.BlockSpec((1, tile_l, D), lambda b, t: (b, t, 0)),
            pl.BlockSpec((1, D, K), lambda b, t: (b, 0, 0)),
            pl.BlockSpec((1, K, D), lambda b, t: (b, 0, 0)),
            const_spec(params["ln1_w"]), const_spec(params["ln1_b"]),
            const_spec(wq_b), const_spec(params["bq"]),
            const_spec(wo_b), const_spec(params["bo"]),
            const_spec(params["ln2_w"]), const_spec(params["ln2_b"]),
            const_spec(w1_b), const_spec(params["b1"]),
            const_spec(w2_b), const_spec(params["b2"]),
        ],
        out_specs=pl.BlockSpec((1, tile_l, D), lambda b, t: (b, t, 0)),
        scratch_shapes=[pltpu.VMEM((tile_l, D), jnp.bfloat16)],
        compiler_params=cp(("parallel", "parallel")),
    )(x, kE, vF, params["ln1_w"], params["ln1_b"], wq_b, params["bq"],
      wo_b, params["bo"], params["ln2_w"], params["ln2_b"],
      w1_b, params["b1"], w2_b, params["b2"])
    return out


# ---------------------------------------------------------------------------
# Pure-JAX reference mirroring the PyTorch module (f32 everywhere).
# ---------------------------------------------------------------------------
def ref_forward(x, p, n_heads):
    def ln(v, w, b):
        mu = v.mean(-1, keepdims=True)
        var = ((v - mu) ** 2).mean(-1, keepdims=True)
        return (v - mu) / jnp.sqrt(var + 1e-5) * w + b

    h = ln(x, p["ln1_w"][0], p["ln1_b"][0])
    q = h @ p["wq"] + p["bq"][0]
    k = h @ p["wk"] + p["bk"][0]
    v = h @ p["wv"] + p["bv"][0]
    B, L, D = q.shape
    dh = D // n_heads
    q = q.reshape(B, L, n_heads, dh).transpose(0, 2, 1, 3)
    k = k.reshape(B, L, n_heads, dh).transpose(0, 2, 3, 1)
    v = v.reshape(B, L, n_heads, dh).transpose(0, 2, 3, 1)
    k = k @ p["E"][:L]
    v = (v @ p["F"][:L]).transpose(0, 1, 3, 2)
    qk = (q @ k) * (dh ** -0.5)
    attn = jax.nn.softmax(qk, axis=-1)
    va = (attn @ v).transpose(0, 2, 1, 3).reshape(B, L, D)
    x1 = x + (va @ p["wo"] + p["bo"][0])
    h2 = ln(x1, p["ln2_w"][0], p["ln2_b"][0])
    f = jax.nn.gelu(h2 @ p["w1"] + p["b1"][0], approximate=False)
    return x1 + (f @ p["w2"] + p["b2"][0])


def init_params(key, seq_len, dim, mlp_dim, kproj):
    ks = jax.random.split(key, 10)
    w = lambda k, s: (0.05 * jax.random.normal(k, s)).astype(jnp.float32)
    return {
        "ln1_w": jnp.ones((1, dim), jnp.float32),
        "ln1_b": jnp.zeros((1, dim), jnp.float32),
        "wq": w(ks[0], (dim, dim)), "bq": w(ks[1], (1, dim)),
        "wk": w(ks[2], (dim, dim)), "bk": w(ks[3], (1, dim)),
        "wv": w(ks[4], (dim, dim)), "bv": w(ks[5], (1, dim)),
        "E": jax.random.normal(ks[6], (seq_len, kproj), jnp.float32),
        "F": jax.random.normal(ks[7], (seq_len, kproj), jnp.float32),
        "wo": w(ks[8], (dim, dim)), "bo": jnp.zeros((1, dim), jnp.float32),
        "ln2_w": jnp.ones((1, dim), jnp.float32),
        "ln2_b": jnp.zeros((1, dim), jnp.float32),
        "w1": w(ks[9], (dim, mlp_dim)), "b1": jnp.zeros((1, mlp_dim), jnp.float32),
        "w2": w(jax.random.fold_in(key, 99), (mlp_dim, dim)),
        "b2": jnp.zeros((1, dim), jnp.float32),
    }


if __name__ == "__main__":
    B, L, D, H, M, K = 2, 8, 32, 4, 64, 4
    key = jax.random.PRNGKey(0)
    pkey, xkey = jax.random.split(key)
    params = init_params(pkey, L, D, M, K)
    x = jax.random.normal(xkey, (B, L, D), jnp.float32)

    out = transformer_block(x, params, n_heads=H)
    out = jax.block_until_ready(out)

    ref = ref_forward(x, params, n_heads=H)
    # bf16 MXU operands + bf16 x in pass 1 + approx reciprocal => loosened
    # tolerance vs the f32 reference.
    np.testing.assert_allclose(np.asarray(out), np.asarray(ref),
                               atol=3e-2, rtol=3e-2)

    print("KERNEL_OK")
</pallas_src>

<mosaic_0001>
module attributes {stable_mosaic.version = 11 : i64} {
  func.func @kv_proj_kernel(%arg0: i32, %arg1: i32, %arg2: memref<1x8x32xbf16, #tpu.memory_space<vmem>>, %arg3: memref<1x32xf32, #tpu.memory_space<vmem>>, %arg4: memref<1x32xf32, #tpu.memory_space<vmem>>, %arg5: memref<32x32xbf16, #tpu.memory_space<vmem>>, %arg6: memref<1x32xf32, #tpu.memory_space<vmem>>, %arg7: memref<32x32xbf16, #tpu.memory_space<vmem>>, %arg8: memref<1x32xf32, #tpu.memory_space<vmem>>, %arg9: memref<8x4xbf16, #tpu.memory_space<vmem>>, %arg10: memref<8x4xbf16, #tpu.memory_space<vmem>>, %arg11: memref<1x32x4xbf16, #tpu.memory_space<vmem>>, %arg12: memref<1x4x32xbf16, #tpu.memory_space<vmem>>, %arg13: memref<32x4xf32, #tpu.memory_space<vmem>>, %arg14: memref<4x32xf32, #tpu.memory_space<vmem>>) attributes {dimension_semantics = [#tpu.dimension_semantics<parallel>, #tpu.dimension_semantics<arbitrary>], iteration_bounds = array<i64: 2, 1>, scalar_prefetch = 0 : i64, scratch_operands = 2 : i64, tpu.core_type = #tpu.core_type<tc>, window_params = [{transform_indices = @transform_0, window_bounds = array<i64: 1, 8, 32>}, {pipeline_mode = #tpu.pipeline_mode<synchronous>, transform_indices = @transform_1, window_bounds = array<i64: 1, 32>}, {pipeline_mode = #tpu.pipeline_mode<synchronous>, transform_indices = @transform_2, window_bounds = array<i64: 1, 32>}, {pipeline_mode = #tpu.pipeline_mode<synchronous>, transform_indices = @transform_3, window_bounds = array<i64: 32, 32>}, {pipeline_mode = #tpu.pipeline_mode<synchronous>, transform_indices = @transform_4, window_bounds = array<i64: 1, 32>}, {pipeline_mode = #tpu.pipeline_mode<synchronous>, transform_indices = @transform_5, window_bounds = array<i64: 32, 32>}, {pipeline_mode = #tpu.pipeline_mode<synchronous>, transform_indices = @transform_6, window_bounds = array<i64: 1, 32>}, {pipeline_mode = #tpu.pipeline_mode<synchronous>, transform_indices = @transform_7, window_bounds = array<i64: 8, 4>}, {pipeline_mode = #tpu.pipeline_mode<synchronous>, transform_indices = @transform_8, window_bounds = array<i64: 8, 4>}, {transform_indices = @transform_9, window_bounds = array<i64: 1, 32, 4>}, {transform_indices = @transform_10, window_bounds = array<i64: 1, 4, 32>}]} {
    %c0_i32 = arith.constant 0 : i32
    %0 = arith.cmpi eq, %arg1, %c0_i32 : i32
    %1 = arith.extui %0 : i1 to i32
    %c0_i32_0 = arith.constant 0 : i32
    %2 = arith.cmpi ne, %1, %c0_i32_0 : i32
    scf.if %2 {
      %cst_35 = arith.constant 0.000000e+00 : f32
      %60 = vector.broadcast %cst_35 : f32 to vector<32x4xf32>
      %c0_36 = arith.constant 0 : index
      %c0_37 = arith.constant 0 : index
      %61 = vector.load %arg13[%c0_36, %c0_37] : memref<32x4xf32, #tpu.memory_space<vmem>>, vector<32x4xf32>
      tpu.vector_store %arg13[%c0_36, %c0_37], %60 {strides = array<i32>} : memref<32x4xf32, #tpu.memory_space<vmem>>, vector<32x4xf32>,
      %cst_38 = arith.constant 0.000000e+00 : f32
      %62 = vector.broadcast %cst_38 : f32 to vector<4x32xf32>
      %c0_39 = arith.constant 0 : index
      %c0_40 = arith.constant 0 : index
      %63 = vector.load %arg14[%c0_39, %c0_40] : memref<4x32xf32, #tpu.memory_space<vmem>>, vector<4x32xf32>
      tpu.vector_store %arg14[%c0_39, %c0_40], %62 {strides = array<i32>} : memref<4x32xf32, #tpu.memory_space<vmem>>, vector<4x32xf32>,
    } else {
    }
    %c0 = arith.constant 0 : index
    %c0_1 = arith.constant 0 : index
    %c0_2 = arith.constant 0 : index
    %3 = vector.load %arg2[%c0, %c0_1, %c0_2] : memref<1x8x32xbf16, #tpu.memory_space<vmem>>, vector<1x8x32xbf16>
    %4 = vector.shape_cast %3 : vector<1x8x32xbf16> to vector<8x32xbf16>
    %5 = arith.extf %4 : vector<8x32xbf16> to vector<8x32xf32>
    %c0_3 = arith.constant 0 : index
    %c0_4 = arith.constant 0 : index
    %6 = vector.load %arg3[%c0_3, %c0_4] : memref<1x32xf32, #tpu.memory_space<vmem>>, vector<1x32xf32>
    %c0_5 = arith.constant 0 : index
    %c0_6 = arith.constant 0 : index
    %7 = vector.load %arg4[%c0_5, %c0_6] : memref<1x32xf32, #tpu.memory_space<vmem>>, vector<1x32xf32>
    %cst = arith.constant dense<0.000000e+00> : vector<8xf32>
    %8 = vector.multi_reduction <add>, %5, %cst [1] : vector<8x32xf32> to vector<8xf32>
    %9 = vector.shape_cast %8 : vector<8xf32> to vector<8x1xf32>
    %cst_7 = arith.constant 3.200000e+01 : f32
    %10 = vector.broadcast %cst_7 : f32 to vector<8x1xf32>
    %11 = arith.divf %9, %10 : vector<8x1xf32>
    %12 = vector.broadcast %11 : vector<8x1xf32> to vector<8x32xf32>
    %13 = arith.subf %5, %12 : vector<8x32xf32>
    %14 = arith.mulf %13, %13 : vector<8x32xf32>
    %cst_8 = arith.constant dense<0.000000e+00> : vector<8xf32>
    %15 = vector.multi_reduction <add>, %14, %cst_8 [1] : vector<8x32xf32> to vector<8xf32>
    %16 = vector.shape_cast %15 : vector<8xf32> to vector<8x1xf32>
    %cst_9 = arith.constant 3.200000e+01 : f32
    %17 = vector.broadcast %cst_9 : f32 to vector<8x1xf32>
    %18 = arith.divf %16, %17 : vector<8x1xf32>
    %19 = vector.broadcast %11 : vector<8x1xf32> to vector<8x32xf32>
    %20 = arith.subf %5, %19 : vector<8x32xf32>
    %cst_10 = arith.constant 9.99999974E-6 : f32
    %21 = vector.broadcast %cst_10 : f32 to vector<8x1xf32>
    %22 = arith.addf %18, %21 : vector<8x1xf32>
    %23 = math.rsqrt %22 : vector<8x1xf32>
    %24 = vector.broadcast %23 : vector<8x1xf32> to vector<8x32xf32>
    %25 = arith.mulf %20, %24 : vector<8x32xf32>
    %26 = vector.broadcast %6 : vector<1x32xf32> to vector<8x32xf32>
    %27 = arith.mulf %25, %26 : vector<8x32xf32>
    %28 = vector.broadcast %7 : vector<1x32xf32> to vector<8x32xf32>
    %29 = arith.addf %27, %28 : vector<8x32xf32>
    %30 = arith.truncf %29 : vector<8x32xf32> to vector<8x32xbf16>
    %c0_11 = arith.constant 0 : index
    %c0_12 = arith.constant 0 : index
    %31 = vector.load %arg5[%c0_11, %c0_12] : memref<32x32xbf16, #tpu.memory_space<vmem>>, vector<32x32xbf16>
    %cst_13 = arith.constant dense<0.000000e+00> : vector<8x32xf32>
    %32 = tpu.matmul %30, %31, %cst_13 {dimension_numbers = #tpu.dot_dimension_numbers<[1], [0], [0], [1], [0, 0, 1, 1], [], []>} : vector<8x32xbf16>, vector<32x32xbf16>, vector<8x32xf32> -> vector<8x32xf32>
    %c0_14 = arith.constant 0 : index
    %c0_15 = arith.constant 0 : index
    %33 = vector.load %arg6[%c0_14, %c0_15] : memref<1x32xf32, #tpu.memory_space<vmem>>, vector<1x32xf32>
    %34 = vector.broadcast %33 : vector<1x32xf32> to vector<8x32xf32>
    %35 = arith.addf %32, %34 : vector<8x32xf32>
    %36 = arith.truncf %35 : vector<8x32xf32> to vector<8x32xbf16>
    %c0_16 = arith.constant 0 : index
    %c0_17 = arith.constant 0 : index
    %37 = vector.load %arg7[%c0_16, %c0_17] : memref<32x32xbf16, #tpu.memory_space<vmem>>, vector<32x32xbf16>
    %cst_18 = arith.constant dense<0.000000e+00> : vector<8x32xf32>
    %38 = tpu.matmul %30, %37, %cst_18 {dimension_numbers = #tpu.dot_dimension_numbers<[1], [0], [0], [1], [0, 0, 1, 1], [], []>} : vector<8x32xbf16>, vector<32x32xbf16>, vector<8x32xf32> -> vector<8x32xf32>
    %c0_19 = arith.constant 0 : index
    %c0_20 = arith.constant 0 : index
    %39 = vector.load %arg8[%c0_19, %c0_20] : memref<1x32xf32, #tpu.memory_space<vmem>>, vector<1x32xf32>
    %40 = vector.broadcast %39 : vector<1x32xf32> to vector<8x32xf32>
    %41 = arith.addf %38, %40 : vector<8x32xf32>
    %42 = arith.truncf %41 : vector<8x32xf32> to vector<8x32xbf16>
    %c8_i32 = arith.constant 8 : i32
    %43 = arith.muli %arg1, %c8_i32 : i32
    %44 = tpu.assume_multiple %43, 8 : i32
    %45 = arith.index_cast %44 : i32 to index
    %c0_21 = arith.constant 0 : index
    %46 = vector.load %arg9[%45, %c0_21] : memref<8x4xbf16, #tpu.memory_space<vmem>>, vector<8x4xbf16>
    %47 = arith.index_cast %44 : i32 to index
    %c0_22 = arith.constant 0 : index
    %48 = vector.load %arg10[%47, %c0_22] : memref<8x4xbf16, #tpu.memory_space<vmem>>, vector<8x4xbf16>
    %c0_23 = arith.constant 0 : index
    %c0_24 = arith.constant 0 : index
    %49 = vector.load %arg13[%c0_23, %c0_24] : memref<32x4xf32, #tpu.memory_space<vmem>>, vector<32x4xf32>
    %cst_25 = arith.constant dense<0.000000e+00> : vector<32x4xf32>
    %50 = tpu.matmul %36, %46, %cst_25 {dimension_numbers = #tpu.dot_dimension_numbers<[0], [0], [1], [1], [0, 1, 1, 1], [], []>} : vector<8x32xbf16>, vector<8x4xbf16>, vector<32x4xf32> -> vector<32x4xf32>
    %51 = arith.addf %49, %50 : vector<32x4xf32>
    %c0_26 = arith.constant 0 : index
    %c0_27 = arith.constant 0 : index
    %52 = vector.load %arg13[%c0_26, %c0_27] : memref<32x4xf32, #tpu.memory_space<vmem>>, vector<32x4xf32>
    tpu.vector_store %arg13[%c0_26, %c0_27], %51 {strides = array<i32>} : memref<32x4xf32, #tpu.memory_space<vmem>>, vector<32x4xf32>,
    %c0_28 = arith.constant 0 : index
    %c0_29 = arith.constant 0 : index
    %53 = vector.load %arg14[%c0_28, %c0_29] : memref<4x32xf32, #tpu.memory_space<vmem>>, vector<4x32xf32>
    %cst_30 = arith.constant dense<0.000000e+00> : vector<4x32xf32>
    %54 = tpu.matmul %48, %42, %cst_30 {dimension_numbers = #tpu.dot_dimension_numbers<[0], [0], [1], [1], [0, 1, 1, 1], [], []>} : vector<8x4xbf16>, vector<8x32xbf16>, vector<4x32xf32> -> vector<4x32xf32>
    %55 = arith.addf %53, %54 : vector<4x32xf32>
    %c0_31 = arith.constant 0 : index
    %c0_32 = arith.constant 0 : index
    %56 = vector.load %arg14[%c0_31, %c0_32] : memref<4x32xf32, #tpu.memory_space<vmem>>, vector<4x32xf32>
    tpu.vector_store %arg14[%c0_31, %c0_32], %55 {strides = array<i32>} : memref<4x32xf32, #tpu.memory_space<vmem>>, vector<4x32xf32>,
    %c0_i32_33 = arith.constant 0 : i32
    %57 = arith.cmpi eq, %arg1, %c0_i32_33 : i32
    %58 = arith.extui %57 : i1 to i32
    %c0_i32_34 = arith.constant 0 : i32
    %59 = arith.cmpi ne, %58, %c0_i32_34 : i32
    scf.if %59 {
      %c0_35 = arith.constant 0 : index
      %c0_36 = arith.constant 0 : index
      %60 = vector.load %arg13[%c0_35, %c0_36] : memref<32x4xf32, #tpu.memory_space<vmem>>, vector<32x4xf32>
      %cst_37 = arith.constant 0.353553385 : f32
      %61 = vector.broadcast %cst_37 : f32 to vector<32x4xf32>
      %62 = arith.mulf %60, %61 : vector<32x4xf32>
      %63 = arith.truncf %62 : vector<32x4xf32> to vector<32x4xbf16>
      %c0_38 = arith.constant 0 : index
      %c0_39 = arith.constant 0 : index
      %c0_40 = arith.constant 0 : index
      %64 = vector.load %arg11[%c0_38, %c0_39, %c0_40] : memref<1x32x4xbf16, #tpu.memory_space<vmem>>, vector<1x32x4xbf16>
      %65 = vector.shape_cast %64 : vector<1x32x4xbf16> to vector<32x4xbf16>
      %66 = vector.shape_cast %63 : vector<32x4xbf16> to vector<1x32x4xbf16>
      tpu.vector_store %arg11[%c0_38, %c0_39, %c0_40], %66 {strides = array<i32>} : memref<1x32x4xbf16, #tpu.memory_space<vmem>>, vector<1x32x4xbf16>,
      %c0_41 = arith.constant 0 : index
      %c0_42 = arith.constant 0 : index
      %67 = vector.load %arg14[%c0_41, %c0_42] : memref<4x32xf32, #tpu.memory_space<vmem>>, vector<4x32xf32>
      %68 = arith.truncf %67 : vector<4x32xf32> to vector<4x32xbf16>
      %c0_43 = arith.constant 0 : index
      %c0_44 = arith.constant 0 : index
      %c0_45 = arith.constant 0 : index
      %69 = vector.load %arg12[%c0_43, %c0_44, %c0_45] : memref<1x4x32xbf16, #tpu.memory_space<vmem>>, vector<1x4x32xbf16>
      %70 = vector.shape_cast %69 : vector<1x4x32xbf16> to vector<4x32xbf16>
      %71 = vector.shape_cast %68 : vector<4x32xbf16> to vector<1x4x32xbf16>
      tpu.vector_store %arg12[%c0_43, %c0_44, %c0_45], %71 {strides = array<i32>} : memref<1x4x32xbf16, #tpu.memory_space<vmem>>, vector<1x4x32xbf16>,
    } else {
    }
    return
  }
  func.func @transform_0(%arg0: i32, %arg1: i32) -> (i32, i32, i32) {
    %c0_i32 = arith.constant 0 : i32
    %c0_i32_0 = arith.constant 0 : i32
    return %arg0, %arg1, %c0_i32 : i32, i32, i32
  }
  func.func @transform_1(%arg0: i32, %arg1: i32) -> (i32, i32) {
    %c0_i32 = arith.constant 0 : i32
    %c0_i32_0 = arith.constant 0 : i32
    %c0_i32_1 = arith.constant 0 : i32
    return %c0_i32, %c0_i32_0 : i32, i32
  }
  func.func @transform_2(%arg0: i32, %arg1: i32) -> (i32, i32) {
    %c0_i32 = arith.constant 0 : i32
    %c0_i32_0 = arith.constant 0 : i32
    %c0_i32_1 = arith.constant 0 : i32
    return %c0_i32, %c0_i32_0 : i32, i32
  }
  func.func @transform_3(%arg0: i32, %arg1: i32) -> (i32, i32) {
    %c0_i32 = arith.constant 0 : i32
    %c0_i32_0 = arith.constant 0 : i32
    %c0_i32_1 = arith.constant 0 : i32
    return %c0_i32, %c0_i32_0 : i32, i32
  }
  func.func @transform_4(%arg0: i32, %arg1: i32) -> (i32, i32) {
    %c0_i32 = arith.constant 0 : i32
    %c0_i32_0 = arith.constant 0 : i32
    %c0_i32_1 = arith.constant 0 : i32
    return %c0_i32, %c0_i32_0 : i32, i32
  }
  func.func @transform_5(%arg0: i32, %arg1: i32) -> (i32, i32) {
    %c0_i32 = arith.constant 0 : i32
    %c0_i32_0 = arith.constant 0 : i32
    %c0_i32_1 = arith.constant 0 : i32
    return %c0_i32, %c0_i32_0 : i32, i32
  }
  func.func @transform_6(%arg0: i32, %arg1: i32) -> (i32, i32) {
    %c0_i32 = arith.constant 0 : i32
    %c0_i32_0 = arith.constant 0 : i32
    %c0_i32_1 = arith.constant 0 : i32
    return %c0_i32, %c0_i32_0 : i32, i32
  }
  func.func @transform_7(%arg0: i32, %arg1: i32) -> (i32, i32) {
    %c0_i32 = arith.constant 0 : i32
    %c0_i32_0 = arith.constant 0 : i32
    %c0_i32_1 = arith.constant 0 : i32
    return %c0_i32, %c0_i32_0 : i32, i32
  }
  func.func @transform_8(%arg0: i32, %arg1: i32) -> (i32, i32) {
    %c0_i32 = arith.constant 0 : i32
    %c0_i32_0 = arith.constant 0 : i32
    %c0_i32_1 = arith.constant 0 : i32
    return %c0_i32, %c0_i32_0 : i32, i32
  }
  func.func @transform_9(%arg0: i32, %arg1: i32) -> (i32, i32, i32) {
    %c0_i32 = arith.constant 0 : i32
    %c0_i32_0 = arith.constant 0 : i32
    %c0_i32_1 = arith.constant 0 : i32
    return %arg0, %c0_i32, %c0_i32_0 : i32, i32, i32
  }
  func.func @transform_10(%arg0: i32, %arg1: i32) -> (i32, i32, i32) {
    %c0_i32 = arith.constant 0 : i32
    %c0_i32_0 = arith.constant 0 : i32
    %c0_i32_1 = arith.constant 0 : i32
    return %arg0, %c0_i32, %c0_i32_0 : i32, i32, i32
  }
}

</mosaic_0001>

<llo_original>
// kernel: tpu_custom_call.1
$region0: #{tpu_custom_call.1}
  #allocation0 [shape = 'u32[]', space=smem, size = 0x4, offset = 0x4, fixed_abs, tag = 'smem constant byte address 0x4 - core index']
  #allocation1 [shape = 'u32[144,128]{1,0:T(1,128)}', space=vmem, size = 0x12000, scoped, tag = 'internal scratch']
  #allocation2 [shape = 'f32[32,4]{1,0:T(8,128)}', space=vmem, size = 0x4000, scoped, tag = 'scratch operand']
  #allocation3 [shape = 'f32[4,32]{1,0:T(4,128)}', space=vmem, size = 0x800, scoped, tag = 'scratch operand']
  %s0 = inlined_call_operand.hbm [shape: bf16[2,8,32], index: 0, kind: input, shape index: {}]
  %s1 = inlined_call_operand.vmem [shape: f32[1,32], index: 1, kind: input, shape index: {}]
  %s2 = inlined_call_operand.vmem [shape: f32[1,32], index: 2, kind: input, shape index: {}]
  %s3 = inlined_call_operand.vmem [shape: bf16[32,32], index: 3, kind: input, shape index: {}]
  %s4 = inlined_call_operand.vmem [shape: f32[1,32], index: 4, kind: input, shape index: {}]
  %s5 = inlined_call_operand.hbm [shape: bf16[32,32], index: 5, kind: input, shape index: {}]
  %s6 = inlined_call_operand.vmem [shape: f32[1,32], index: 6, kind: input, shape index: {}]
  %s7 = inlined_call_operand.vmem [shape: bf16[8,4], index: 7, kind: input, shape index: {}]
  %s8 = inlined_call_operand.vmem [shape: bf16[8,4], index: 8, kind: input, shape index: {}]
  %s9 = inlined_call_operand.vmem [shape: bf16[2,32,4], index: 9, kind: output, shape index: {0}]
  %s10 = inlined_call_operand.hbm [shape: bf16[2,4,32], index: 10, kind: output, shape index: {1}]
  %11 = xla_tuple %s9, %s10
  %s12 = sld [smem:[#allocation0]]
  $region93: #{tpu_custom_call.1} parent=0
    _
  %s14 = ssub.s32 1, %s12
  %s15 = scalar_select 0, %s14, %s12
  $region1: #{tpu_custom_call.1} parent=0
    #allocation4 [shape = 'u8[4096]{0}', space=vmem, size = 0x1000, scoped, tag = 'input window, operand 0']
    #allocation5 [shape = 's32[2]{0}', space=sflag, size = 0x8, scoped, tag = 'scoped memory for tpu_custom_call.1']
    #allocation6 [shape = 's32[2]{0}', space=sflag, size = 0x8, scoped, tag = 'scoped memory for tpu_custom_call.1']
    #allocation7 [shape = 'u8[8192]{0}', space=vmem, size = 0x2000, scoped, tag = 'input window, operand 5, single buffered']
    #allocation8 [shape = 's32[1]{0}', space=sflag, size = 0x4, scoped, tag = 'scoped memory for tpu_custom_call.1']
    #allocation9 [shape = 'u8[2048]{0}', space=vmem, size = 0x800, scoped, tag = 'output window, operand 1']
    %16 = vsyncpa [#allocation5], 0
    %s17 = scalar_lea.sflag [#allocation5], 1
    %18 = vsyncpa %s17, 0
    %19 = vsyncpa [#allocation8], 0
    %20 = vsyncpa [#allocation6], 0
    %s21 = scalar_lea.sflag [#allocation6], 1
    %22 = vsyncpa %s21, 0
    loop: start=0, step=1, limit=4
    $region2: #{tpu_custom_call.1} parent=1 // loop_pre_header
      _
    $region3: #{tpu_custom_call.1} parent=1 // loop_header
      %s24 = sphi 0, %s28
      %p25 = scmp.ge.s32.totalorder %s24, 4
      %s31 = sphi 0, %s43
      %s32 = sphi 0, %s39
      %s33 = sphi 0, %s31
      %s34 = sphi 0, %s32
      %s35 = sphi 0, %s33
      %s36 = sphi 0, %s34
      %s48 = sphi 0, %s50
      %s51 = sphi 0, %s48
      %s52 = sphi 0, %s51
      %s68 = sphi 0, %s52
      %s72 = sphi 0, %s72
      %s74 = sphi 0, %s72
      %s75 = sphi 0, %s74
      %s89 = sphi 0, %s75
      %s93 = sphi 0, %s93
      %s95 = sphi 0, %s93
      %s96 = sphi 0, %s95
      %s110 = sphi 0, %s96
      %s114 = sphi 0, %s114
      %s116 = sphi 0, %s114
      %s117 = sphi 0, %s116
      %s131 = sphi 0, %s117
      %s135 = sphi 0, %s135
      %s137 = sphi 0, %s135
      %s138 = sphi 0, %s137
      %s152 = sphi 0, %s138
      %s156 = sphi 0, %s156
      %s158 = sphi 0, %s156
      %s159 = sphi 0, %s158
      %s173 = sphi 0, %s159
      %s177 = sphi 0, %s177
      %s179 = sphi 0, %s177
      %s180 = sphi 0, %s179
      %s194 = sphi 0, %s180
      %s198 = sphi 0, %s198
      %s200 = sphi 0, %s198
      %s201 = sphi 0, %s200
      %s215 = sphi 0, %s201
      %s219 = sphi 0, %s219
      %s221 = sphi 0, %s219
      %s222 = sphi 0, %s221
      %s236 = sphi 0, %s222
      %s242 = sphi 0, %s244
      %s245 = sphi 0, %s242
      %s246 = sphi 0, %s245
      %s262 = sphi 0, %s246
      %s268 = sphi 0, %s270
      %s271 = sphi 0, %s268
      %s272 = sphi 0, %s271
      %s288 = sphi 0, %s272
    $region4: #{tpu_custom_call.1} parent=1 // loop_header_branch
      %27 = sbr.rel (%p25) target = $region8
    $region5: #{tpu_custom_call.1} parent=1 // loop_body
      %s29 = ssub.s32 %s24, 1
      %s30 = ssub.s32 %s24, 2
      %s37 = sadd.s32 1, %s32
      %p38 = scmp.ge.s32.totalorder %s37, 1
      %s39 = scalar_select %p38, 0, %s37
      %s40 = sadd.s32 1, %s31
      %s41 = scalar_select %p38, %s40, %s31
      %p42 = scmp.ge.s32.totalorder %s41, 2
      %s43 = scalar_select %p42, 0, %s41
      %s44 = ssub.s32 %s31, %s43
      %s45 = ssub.s32 %s32, %s39
      %s46 = sor.u32 %s44, %s45
      %p47 = scmp.eq.s32.totalorder %s46, 0
      %s49 = sadd.s32 %s48, 1
      %s50 = scalar_select %p47, %s48, %s49
      %p53 = pneg %p47
      %p54 = scmp.eq.s32.totalorder %s24, 1
      %p55 = por %p53, %p54
      %p56 = scmp.ne.s32.totalorder %s48, %s51
      %p57 = scmp.eq.s32.totalorder %s24, 0
      %p58 = por %p56, %p57
      %p59 = scmp.ne.s32.totalorder %s48, %s51
      %p60 = scmp.eq.s32.totalorder %s29, 1
      %p61 = por %p59, %p60
      %p62 = scmp.ne.s32.totalorder %s51, %s52
      %p63 = scmp.eq.s32.totalorder %s29, 0
      %p64 = por %p62, %p63
      %p65 = scmp.ne.s32.totalorder %s51, %s52
      %p66 = scmp.eq.s32.totalorder %s30, 1
      %p67 = por %p65, %p66
      %p69 = scmp.ne.s32.totalorder %s52, %s68
      %p70 = scmp.eq.s32.totalorder %s30, 0
      %p71 = por %p69, %p70
      %s73 = sadd.s32 %s72, 1
      %p76 = scmp.eq.s32.totalorder %s24, 1
      %p77 = scmp.ne.s32.totalorder %s72, %s74
      %p78 = scmp.eq.s32.totalorder %s24, 0
      %p79 = por %p77, %p78
      %p80 = scmp.ne.s32.totalorder %s72, %s74
      %p81 = scmp.eq.s32.totalorder %s29, 1
      %p82 = por %p80, %p81
      %p83 = scmp.ne.s32.totalorder %s74, %s75
      %p84 = scmp.eq.s32.totalorder %s29, 0
      %p85 = por %p83, %p84
      %p86 = scmp.ne.s32.totalorder %s74, %s75
      %p87 = scmp.eq.s32.totalorder %s30, 1
      %p88 = por %p86, %p87
      %p90 = scmp.ne.s32.totalorder %s75, %s89
      %p91 = scmp.eq.s32.totalorder %s30, 0
      %p92 = por %p90, %p91
      %s94 = sadd.s32 %s93, 1
      %p97 = scmp.eq.s32.totalorder %s24, 1
      %p98 = scmp.ne.s32.totalorder %s93, %s95
      %p99 = scmp.eq.s32.totalorder %s24, 0
      %p100 = por %p98, %p99
      %p101 = scmp.ne.s32.totalorder %s93, %s95
      %p102 = scmp.eq.s32.totalorder %s29, 1
      %p103 = por %p101, %p102
      %p104 = scmp.ne.s32.totalorder %s95, %s96
      %p105 = scmp.eq.s32.totalorder %s29, 0
      %p106 = por %p104, %p105
      %p107 = scmp.ne.s32.totalorder %s95, %s96
      %p108 = scmp.eq.s32.totalorder %s30, 1
      %p109 = por %p107, %p108
      %p111 = scmp.ne.s32.totalorder %s96, %s110
      %p112 = scmp.eq.s32.totalorder %s30, 0
      %p113 = por %p111, %p112
      %s115 = sadd.s32 %s114, 1
      %p118 = scmp.eq.s32.totalorder %s24, 1
      %p119 = scmp.ne.s32.totalorder %s114, %s116
      %p120 = scmp.eq.s32.totalorder %s24, 0
      %p121 = por %p119, %p120
      %p122 = scmp.ne.s32.totalorder %s114, %s116
      %p123 = scmp.eq.s32.totalorder %s29, 1
      %p124 = por %p122, %p123
      %p125 = scmp.ne.s32.totalorder %s116, %s117
      %p126 = scmp.eq.s32.totalorder %s29, 0
      %p127 = por %p125, %p126
      %p128 = scmp.ne.s32.totalorder %s116, %s117
      %p129 = scmp.eq.s32.totalorder %s30, 1
      %p130 = por %p128, %p129
      %p132 = scmp.ne.s32.totalorder %s117, %s131
      %p133 = scmp.eq.s32.totalorder %s30, 0
      %p134 = por %p132, %p133
      %s136 = sadd.s32 %s135, 1
      %p139 = scmp.eq.s32.totalorder %s24, 1
      %p140 = scmp.ne.s32.totalorder %s135, %s137
      %p141 = scmp.eq.s32.totalorder %s24, 0
      %p142 = por %p140, %p141
      %p143 = scmp.ne.s32.totalorder %s135, %s137
      %p144 = scmp.eq.s32.totalorder %s29, 1
      %p145 = por %p143, %p144
      %p146 = scmp.ne.s32.totalorder %s137, %s138
      %p147 = scmp.eq.s32.totalorder %s29, 0
      %p148 = por %p146, %p147
      %p149 = scmp.ne.s32.totalorder %s137, %s138
      %p150 = scmp.eq.s32.totalorder %s30, 1
      %p151 = por %p149, %p150
      %p153 = scmp.ne.s32.totalorder %s138, %s152
      %p154 = scmp.eq.s32.totalorder %s30, 0
      %p155 = por %p153, %p154
      %s157 = sadd.s32 %s156, 1
      %p160 = scmp.eq.s32.totalorder %s24, 1
      %p161 = scmp.ne.s32.totalorder %s156, %s158
      %p162 = scmp.eq.s32.totalorder %s24, 0
      %p163 = por %p161, %p162
      %p164 = scmp.ne.s32.totalorder %s156, %s158
      %p165 = scmp.eq.s32.totalorder %s29, 1
      %p166 = por %p164, %p165
      %p167 = scmp.ne.s32.totalorder %s158, %s159
      %p168 = scmp.eq.s32.totalorder %s29, 0
      %p169 = por %p167, %p168
      %p170 = scmp.ne.s32.totalorder %s158, %s159
      %p171 = scmp.eq.s32.totalorder %s30, 1
      %p172 = por %p170, %p171
      %p174 = scmp.ne.s32.totalorder %s159, %s173
      %p175 = scmp.eq.s32.totalorder %s30, 0
      %p176 = por %p174, %p175
      %s178 = sadd.s32 %s177, 1
      %p181 = scmp.eq.s32.totalorder %s24, 1
      %p182 = scmp.ne.s32.totalorder %s177, %s179
      %p183 = scmp.eq.s32.totalorder %s24, 0
      %p184 = por %p182, %p183
      %p185 = scmp.ne.s32.totalorder %s177, %s179
      %p186 = scmp.eq.s32.totalorder %s29, 1
      %p187 = por %p185, %p186
      %p188 = scmp.ne.s32.totalorder %s179, %s180
      %p189 = scmp.eq.s32.totalorder %s29, 0
      %p190 = por %p188, %p189
      %p191 = scmp.ne.s32.totalorder %s179, %s180
      %p192 = scmp.eq.s32.totalorder %s30, 1
      %p193 = por %p191, %p192
      %p195 = scmp.ne.s32.totalorder %s180, %s194
      %p196 = scmp.eq.s32.totalorder %s30, 0
      %p197 = por %p195, %p196
      %s199 = sadd.s32 %s198, 1
      %p202 = scmp.eq.s32.totalorder %s24, 1
      %p203 = scmp.ne.s32.totalorder %s198, %s200
      %p204 = scmp.eq.s32.totalorder %s24, 0
      %p205 = por %p203, %p204
      %p206 = scmp.ne.s32.totalorder %s198, %s200
      %p207 = scmp.eq.s32.totalorder %s29, 1
      %p208 = por %p206, %p207
      %p209 = scmp.ne.s32.totalorder %s200, %s201
      %p210 = scmp.eq.s32.totalorder %s29, 0
      %p211 = por %p209, %p210
      %p212 = scmp.ne.s32.totalorder %s200, %s201
      %p213 = scmp.eq.s32.totalorder %s30, 1
      %p214 = por %p212, %p213
      %p216 = scmp.ne.s32.totalorder %s201, %s215
      %p217 = scmp.eq.s32.totalorder %s30, 0
      %p218 = por %p216, %p217
      %s220 = sadd.s32 %s219, 1
      %p223 = scmp.eq.s32.totalorder %s24, 1
      %p224 = scmp.ne.s32.totalorder %s219, %s221
      %p225 = scmp.eq.s32.totalorder %s24, 0
      %p226 = por %p224, %p225
      %p227 = scmp.ne.s32.totalorder %s219, %s221
      %p228 = scmp.eq.s32.totalorder %s29, 1
      %p229 = por %p227, %p228
      %p230 = scmp.ne.s32.totalorder %s221, %s222
      %p231 = scmp.eq.s32.totalorder %s29, 0
      %p232 = por %p230, %p231
      %p233 = scmp.ne.s32.totalorder %s221, %s222
      %p234 = scmp.eq.s32.totalorder %s30, 1
      %p235 = por %p233, %p234
      %p237 = scmp.ne.s32.totalorder %s222, %s236
      %p238 = scmp.eq.s32.totalorder %s30, 0
      %p239 = por %p237, %p238
      %s240 = ssub.s32 %s31, %s43
      %p241 = scmp.eq.s32.totalorder %s240, 0
      %s243 = sadd.s32 %s242, 1
      %s244 = scalar_select %p241, %s242, %s243
      %p247 = pneg %p241
      %p248 = scmp.eq.s32.totalorder %s24, 1
      %p249 = por %p247, %p248
      %p250 = scmp.ne.s32.totalorder %s242, %s245
      %p251 = scmp.eq.s32.totalorder %s24, 0
      %p252 = por %p250, %p251
      %p253 = scmp.ne.s32.totalorder %s242, %s245
      %p254 = scmp.eq.s32.totalorder %s29, 1
      %p255 = por %p253, %p254
      %p256 = scmp.ne.s32.totalorder %s245, %s246
      %p257 = scmp.eq.s32.totalorder %s29, 0
      %p258 = por %p256, %p257
      %p259 = scmp.ne.s32.totalorder %s245, %s246
      %p260 = scmp.eq.s32.totalorder %s30, 1
      %p261 = por %p259, %p260
      %p263 = scmp.ne.s32.totalorder %s246, %s262
      %p264 = scmp.eq.s32.totalorder %s30, 0
      %p265 = por %p263, %p264
      %s266 = ssub.s32 %s31, %s43
      %p267 = scmp.eq.s32.totalorder %s266, 0
      %s269 = sadd.s32 %s268, 1
      %s270 = scalar_select %p267, %s268, %s269
      %p273 = pneg %p267
      %p274 = scmp.eq.s32.totalorder %s24, 1
      %p275 = por %p273, %p274
      %p276 = scmp.ne.s32.totalorder %s268, %s271
      %p277 = scmp.eq.s32.totalorder %s24, 0
      %p278 = por %p276, %p277
      %p279 = scmp.ne.s32.totalorder %s268, %s271
      %p280 = scmp.eq.s32.totalorder %s29, 1
      %p281 = por %p279, %p280
      %p282 = scmp.ne.s32.totalorder %s271, %s272
      %p283 = scmp.eq.s32.totalorder %s29, 0
      %p284 = por %p282, %p283
      %p285 = scmp.ne.s32.totalorder %s271, %s272
      %p286 = scmp.eq.s32.totalorder %s30, 1
      %p287 = por %p285, %p286
      %p289 = scmp.ne.s32.totalorder %s272, %s288
      %p290 = scmp.eq.s32.totalorder %s30, 0
      %p291 = por %p289, %p290
      %p292 = scmp.le.s32.totalorder 1, %s24
      %p293 = scmp.lt.s32.totalorder %s24, 3
      %p294 = pnand %p292, %p293
      %p295 = pneg %p294
      // Predicated region
      $region9: #{tpu_custom_call.1} parent=5 // pred_check
        _
      $region10: #{tpu_custom_call.1} parent=5 // pred_check_branch
        %297 = sbr.rel (%p294) target = $region12
      $region11: #{tpu_custom_call.1} parent=5 // pred_region
        %s298 = ssub.s32 %s24, 1
        // Predicated region
        $region13: #{tpu_custom_call.1} parent=11 // pred_check
          %p299 = pneg %p85
        $region14: #{tpu_custom_call.1} parent=11 // pred_check_branch
          %301 = sbr.rel (%p299) target = $region16
        $region15: #{tpu_custom_call.1} parent=11 // pred_region
          _
        $region16: #{tpu_custom_call.1} parent=11 // pred_fallthru
          _
        // Predicated region
        $region17: #{tpu_custom_call.1} parent=11 // pred_check
          %p302 = pneg %p106
        $region18: #{tpu_custom_call.1} parent=11 // pred_check_branch
          %304 = sbr.rel (%p302) target = $region20
        $region19: #{tpu_custom_call.1} parent=11 // pred_region
          _
        $region20: #{tpu_custom_call.1} parent=11 // pred_fallthru
          _
        // Predicated region
        $region21: #{tpu_custom_call.1} parent=11 // pred_check
          %p305 = pneg %p127
        $region22: #{tpu_custom_call.1} parent=11 // pred_check_branch
          %307 = sbr.rel (%p305) target = $region24
        $region23: #{tpu_custom_call.1} parent=11 // pred_region
          _
        $region24: #{tpu_custom_call.1} parent=11 // pred_fallthru
          _
        // Predicated region
        $region25: #{tpu_custom_call.1} parent=11 // pred_check
          %p308 = pneg %p148
        $region26: #{tpu_custom_call.1} parent=11 // pred_check_branch
          %310 = sbr.rel (%p308) target = $region28
        $region27: #{tpu_custom_call.1} parent=11 // pred_region
          _
        $region28: #{tpu_custom_call.1} parent=11 // pred_fallthru
          _
        // Predicated region
        $region29: #{tpu_custom_call.1} parent=11 // pred_check
          %p311 = pneg %p169
        $region30: #{tpu_custom_call.1} parent=11 // pred_check_branch
          %313 = sbr.rel (%p311) target = $region32
        $region31: #{tpu_custom_call.1} parent=11 // pred_region
          %s315 = ssub.s32 256, 256
          %316 = vsyncadd [#allocation8], %s315
          %s317 = sshll.u32 [#allocation7], 4
          %s318 = int_to_ptr.vmem [resolvable:$true] %s317
          %323 = dma.hbm_to_vmem [thread:$0]  %s5, 256, %s318, [#allocation8], 64, 64, 4
        $region32: #{tpu_custom_call.1} parent=11 // pred_fallthru
          _
        // Predicated region
        $region33: #{tpu_custom_call.1} parent=11 // pred_check
          %p324 = pneg %p190
        $region34: #{tpu_custom_call.1} parent=11 // pred_check_branch
          %326 = sbr.rel (%p324) target = $region36
        $region35: #{tpu_custom_call.1} parent=11 // pred_region
          _
        $region36: #{tpu_custom_call.1} parent=11 // pred_fallthru
          _
        // Predicated region
        $region37: #{tpu_custom_call.1} parent=11 // pred_check
          %p327 = pneg %p211
        $region38: #{tpu_custom_call.1} parent=11 // pred_check_branch
          %329 = sbr.rel (%p327) target = $region40
        $region39: #{tpu_custom_call.1} parent=11 // pred_region
          _
        $region40: #{tpu_custom_call.1} parent=11 // pred_fallthru
          _
        // Predicated region
        $region41: #{tpu_custom_call.1} parent=11 // pred_check
          %p330 = pneg %p232
        $region42: #{tpu_custom_call.1} parent=11 // pred_check_branch
          %332 = sbr.rel (%p330) target = $region44
        $region43: #{tpu_custom_call.1} parent=11 // pred_region
          _
        $region44: #{tpu_custom_call.1} parent=11 // pred_fallthru
          _
      $region12: #{tpu_custom_call.1} parent=5 // pred_fallthru
        _
      %p333 = scmp.lt.s32.totalorder %s24, 2
      // Predicated region
      $region45: #{tpu_custom_call.1} parent=5 // pred_check
        %p334 = pneg %p333
      $region46: #{tpu_custom_call.1} parent=5 // pred_check_branch
        %336 = sbr.rel (%p334) target = $region48
      $region47: #{tpu_custom_call.1} parent=5 // pred_region
        // Predicated region
        $region49: #{tpu_custom_call.1} parent=47 // pred_check
          %p337 = pneg %p58
        $region50: #{tpu_custom_call.1} parent=47 // pred_check_branch
          %339 = sbr.rel (%p337) target = $region52
        $region51: #{tpu_custom_call.1} parent=47 // pred_region
          %s340 = sand.u32 %s48, 1
          %s341 = scalar_lea.sflag [#allocation5], %s340
          %s342 = sand.u32 %s48, 1
          %s343 = smul.addr %s342, 4
          %s344 = scalar_lea.vmem [#allocation4], %s343
          %s346 = ssub.s32 64, 64
          %347 = vsyncadd %s341, %s346
          %s348 = sadd.s32 %s32, %s31
          %s349 = smul.addr %s348, 64
          %s350 = scalar_lea.hbm %s0, %s349
          %s352 = sshll.u32 %s344, 4
          %s353 = int_to_ptr.vmem [resolvable:$true] %s352
          %355 = dma.hbm_to_vmem [thread:$0]  %s350, 64, %s353, %s341
        $region52: #{tpu_custom_call.1} parent=47 // pred_fallthru
          _
      $region48: #{tpu_custom_call.1} parent=5 // pred_fallthru
        _
      %p356 = scmp.le.s32.totalorder 1, %s24
      %p357 = scmp.lt.s32.totalorder %s24, 3
      %p358 = pnand %p356, %p357
      %p359 = pneg %p358
      // Predicated region
      $region53: #{tpu_custom_call.1} parent=5 // pred_check
        _
      $region54: #{tpu_custom_call.1} parent=5 // pred_check_branch
        %361 = sbr.rel (%p358) target = $region56
      $region55: #{tpu_custom_call.1} parent=5 // pred_region
        %s362 = ssub.s32 %s24, 1
        %s363 = sand.u32 %s51, 1
        %s364 = scalar_lea.sflag [#allocation5], %s363
        %s365 = sand.u32 %s51, 1
        %s366 = smul.addr %s365, 4
        %s367 = scalar_lea.vmem [#allocation4], %s366
        // Predicated region
        $region57: #{tpu_custom_call.1} parent=55 // pred_check
          %p368 = pneg %p64
        $region58: #{tpu_custom_call.1} parent=55 // pred_check_branch
          %370 = sbr.rel (%p368) target = $region60
        $region59: #{tpu_custom_call.1} parent=55 // pred_region
          %371 = dma.done %s364, 64
        $region60: #{tpu_custom_call.1} parent=55 // pred_fallthru
          _
        // Predicated region
        $region61: #{tpu_custom_call.1} parent=55 // pred_check
          %p372 = pneg %p169
        $region62: #{tpu_custom_call.1} parent=55 // pred_check_branch
          %374 = sbr.rel (%p372) target = $region64
        $region63: #{tpu_custom_call.1} parent=55 // pred_region
          %375 = dma.done [#allocation8], 256
        $region64: #{tpu_custom_call.1} parent=55 // pred_fallthru
          _
        %s376 = sand.u32 %s51, 1
        %s377 = scalar_lea.sflag [#allocation5], %s376
        %s378 = sand.u32 %s51, 1
        %s379 = smul.addr %s378, 4
        %s380 = scalar_lea.vmem [#allocation4], %s379
        %p381 = pneg %p64
        %p382 = pneg %p61
        %p383 = pneg %p85
        %p384 = pneg %p82
        %p385 = pneg %p106
        %p386 = pneg %p103
        %p387 = pneg %p127
        %p388 = pneg %p124
        %p389 = pneg %p148
        %p390 = pneg %p145
        %p391 = pneg %p169
        %p392 = pneg %p166
        %p393 = pneg %p190
        %p394 = pneg %p187
        %p395 = pneg %p211
        %p396 = pneg %p208
        %p397 = pneg %p232
        %p398 = pneg %p229
        %p399 = pneg %p258
        %p400 = pneg %p255
        %p401 = scmp.lt.s32.totalorder %s33, 1
        %s402 = scalar_select %p401, %s33, 1
        %s403 = smul.addr %s402, 4
        %s404 = smul.addr %s403, 4
        %s405 = scalar_lea.vmem %s9, %s404
        %p406 = pneg %p284
        %p407 = pneg %p281
        %s408 = sand.u32 %s271, 1
        %s409 = scalar_lea.sflag [#allocation6], %s408
        %s410 = sand.u32 %s271, 1
        %s411 = smul.addr %s410, 2
        %s412 = scalar_lea.vmem [#allocation9], %s411
        %p413 = scmp.lt.s32.totalorder %s33, 1
        %s414 = scalar_select %p413, %s33, 1
        %s415 = smul.addr %s414, 4
        %s416 = smul.addr %s415, 4
        %s417 = scalar_lea.vmem %s9, %s416
        %p419 = scmp.eq.s32.totalorder %s34, 0
        // Predicated region
        $region65: #{tpu_custom_call.1} parent=55 // pred_check
          %p420 = pneg %p419
        $region66: #{tpu_custom_call.1} parent=55 // pred_check_branch
          %422 = sbr.rel (%p420) target = $region68
        $region67: #{tpu_custom_call.1} parent=55 // pred_region
          %vm423 = vcmask 31744
          %424 = vst.msk [vmem:[#allocation2] sm:$0xff] %vm423, 0.0
          %425 = vst.msk [vmem:[#allocation2 + $0x8] sm:$0xff] %vm423, 0.0
          %426 = vst.msk [vmem:[#allocation2 + $0x10] sm:$0xff] %vm423, 0.0
          %427 = vst.msk [vmem:[#allocation2 + $0x18] sm:$0xff] %vm423, 0.0
          %vm428 = vcmask 257024
          %429 = vst.msk [vmem:[#allocation3] sm:$0xf] %vm428, 0.0
        $region68: #{tpu_custom_call.1} parent=55 // pred_fallthru
          _
        %v430 = vld [vmem:[%s367] sm:$0xf]
        %v431 = vunpack.c.l.bf16 %v430
        %v432 = vld [vmem:[%s1] sm:$0x1]
        %v433 = vld [vmem:[%s2] sm:$0x1]
        %vm434 = vcmask 261120
        %v435 = vsel %vm434, %v431, 0.0
        %436 = vadd.xlane.f32.xlu0 %v435
        %v437 = vpop.xlane.xlu0 %436
        %v438 = vrcp.pop 32.0
        %v439 = vmul.f32 %v437, %v438
        %v440 = vsub.f32 %v431, %v439
        %v441 = vmul.f32 %v440, %v440
        %v442 = vsel %vm434, %v441, 0.0
        %443 = vadd.xlane.f32.xlu0 %v442
        %v444 = vpop.xlane.xlu0 %443
        %v445 = vmul.f32 %v444, %v438
        %v446 = vadd.f32 %v445, 1e-05
        %v447 = vrsqrt.pop %v446
        %v448 = vmul.f32 %v440, %v447
        %v450 = vlaneseq
        %v451 = vshrl.u32 %v450, 7
        %v452 = vsub.s32 0, %v451
        %v453 = vrot.slane %v432, %v452
        %v455 = vmul.f32 %v448, %v453
        %v457 = vlaneseq
        %v458 = vshrl.u32 %v457, 7
        %v459 = vsub.s32 0, %v458
        %v460 = vrot.slane %v433, %v459
        %v462 = vadd.f32 %v455, %v460
        %v463 = vpack.c.bf16 %v462, %v462
        %v464 = vld [vmem:[%s3] sm:$0xf]
        %v465 = vld [vmem:[%s3 + $0x4] sm:$0xf]
        %v466 = vld [vmem:[%s3 + $0x8] sm:$0xf]
        %v467 = vld [vmem:[%s3 + $0xc] sm:$0xf]
        %v468 = vld [vmem:[%s4] sm:$0x1]
        %v470 = vlaneseq
        %v471 = vshrl.u32 %v470, 7
        %v472 = vsub.s32 0, %v471
        %v473 = vrot.slane %v468, %v472
        %v479 = vunpack.c.l.b16 %v464
        %v480 = vunpack.c.l.b16 %v465
        %v481 = vunpack.c.l.b16 %v466
        %v482 = vunpack.c.l.b16 %v467
        %v483 = vpack.c.b16 %v480, %v479
        %v484 = vpack.c.b16 %v482, %v481
        %v488 = vsel %vm434, %v463, 0
        %490 = vmatprep.subr.bf16.mxu0 0
        %491 = vmatpush1.bf16.msra.mxu0 %v483
        %492 = vmatprep.subr.bf16.mxu0 0
        %493 = vmatpush1.bf16.msra.mxu0 %v484
        %494 = vmatprep.subr.bf16.mxu0 0
        %495 = vmatpush1.bf16.msra.mxu0 0
        %496 = vmatprep.subr.bf16.mxu0 0
        %497 = vmatpush1.bf16.msra.mxu0 0
        %498 = vmatprep.subr.bf16.mxu0 0
        %499 = vmatpush1.bf16.msra.mxu0 0
        %500 = vmatprep.subr.bf16.mxu0 0
        %501 = vmatpush1.bf16.msra.mxu0 0
        %502 = vmatprep.subr.bf16.mxu0 0
        %503 = vmatpush1.bf16.msra.mxu0 0
        %504 = vmatprep.subr.bf16.mxu0 0
        %505 = vmatpush1.bf16.msra.mxu0 0
        %506 = vmatprep.subr.bf16.mxu0 0
        %507 = vmatpush1.bf16.msra.mxu0 0
        %508 = vmatprep.subr.bf16.mxu0 0
        %509 = vmatpush1.bf16.msra.mxu0 0
        %510 = vmatprep.subr.bf16.mxu0 0
        %511 = vmatpush1.bf16.msra.mxu0 0
        %512 = vmatprep.subr.bf16.mxu0 0
        %513 = vmatpush1.bf16.msra.mxu0 0
        %514 = vmatprep.subr.bf16.mxu0 0
        %515 = vmatpush1.bf16.msra.mxu0 0
        %516 = vmatprep.subr.bf16.mxu0 0
        %517 = vmatpush1.bf16.msra.mxu0 0
        %518 = vmatprep.subr.bf16.mxu0 0
        %519 = vmatpush1.bf16.msra.mxu0 0
        %520 = vmatprep.subr.bf16.mxu0 0
        %521 = vmatpush1.bf16.msra.mxu0 0
        %522 = vmatprep.mubr.bf16.mxu0 0
        %523 = vmatmul.mubr.bf16.gmra.mrb[0].mxu0 %v488
        %v524 = vpop.f32.mrb[0].mxu0
        %v525 = vadd.f32 %v473, %v524
        %v526 = vpop.f32.mrb[0].mxu0
        %v527 = vpop.f32.mrb[0].mxu0
        %v528 = vpop.f32.mrb[0].mxu0
        %529 = vdwg.mxu0
        %v530 = vpack.c.bf16 %v525, %v525
        %v531 = vld [vmem:[#allocation7] sm:$0xf]
        %v532 = vld [vmem:[#allocation7 + $0x4] sm:$0xf]
        %v533 = vld [vmem:[#allocation7 + $0x8] sm:$0xf]
        %v534 = vld [vmem:[#allocation7 + $0xc] sm:$0xf]
        %v535 = vld [vmem:[%s6] sm:$0x1]
        %v537 = vlaneseq
        %v538 = vshrl.u32 %v537, 7
        %v539 = vsub.s32 0, %v538
        %v540 = vrot.slane %v535, %v539
        %v546 = vunpack.c.l.b16 %v531
        %v547 = vunpack.c.l.b16 %v532
        %v548 = vunpack.c.l.b16 %v533
        %v549 = vunpack.c.l.b16 %v534
        %v550 = vpack.c.b16 %v547, %v546
        %v551 = vpack.c.b16 %v549, %v548
        %554 = vmatprep.subr.bf16.mxu0 0
        %555 = vmatpush1.bf16.msra.mxu0 %v550
        %556 = vmatprep.subr.bf16.mxu0 0
        %557 = vmatpush1.bf16.msra.mxu0 %v551
        %558 = vmatprep.subr.bf16.mxu0 0
        %559 = vmatpush1.bf16.msra.mxu0 0
        %560 = vmatprep.subr.bf16.mxu0 0
        %561 = vmatpush1.bf16.msra.mxu0 0
        %562 = vmatprep.subr.bf16.mxu0 0
        %563 = vmatpush1.bf16.msra.mxu0 0
        %564 = vmatprep.subr.bf16.mxu0 0
        %565 = vmatpush1.bf16.msra.mxu0 0
        %566 = vmatprep.subr.bf16.mxu0 0
        %567 = vmatpush1.bf16.msra.mxu0 0
        %568 = vmatprep.subr.bf16.mxu0 0
        %569 = vmatpush1.bf16.msra.mxu0 0
        %570 = vmatprep.subr.bf16.mxu0 0
        %571 = vmatpush1.bf16.msra.mxu0 0
        %572 = vmatprep.subr.bf16.mxu0 0
        %573 = vmatpush1.bf16.msra.mxu0 0
        %574 = vmatprep.subr.bf16.mxu0 0
        %575 = vmatpush1.bf16.msra.mxu0 0
        %576 = vmatprep.subr.bf16.mxu0 0
        %577 = vmatpush1.bf16.msra.mxu0 0
        %578 = vmatprep.subr.bf16.mxu0 0
        %579 = vmatpush1.bf16.msra.mxu0 0
        %580 = vmatprep.subr.bf16.mxu0 0
        %581 = vmatpush1.bf16.msra.mxu0 0
        %582 = vmatprep.subr.bf16.mxu0 0
        %583 = vmatpush1.bf16.msra.mxu0 0
        %584 = vmatprep.subr.bf16.mxu0 0
        %585 = vmatpush1.bf16.msra.mxu0 0
        %586 = vmatprep.mubr.bf16.mxu0 0
        %587 = vmatmul.mubr.bf16.gmra.mrb[0].mxu0 %v488
        %v588 = vpop.f32.mrb[0].mxu0
        %v589 = vadd.f32 %v540, %v588
        %v590 = vpop.f32.mrb[0].mxu0
        %v591 = vpop.f32.mrb[0].mxu0
        %v592 = vpop.f32.mrb[0].mxu0
        %593 = vdwg.mxu0
        %v594 = vpack.c.bf16 %v589, %v589
        %s595 = smul.u32 %s34, 8
        %s596 = sshra.s32 %s595, 3
        %s597 = sand.u32 %s595, 7
        %s598 = smul.addr %s596, 4
        %s599 = scalar_lea.vmem %s7, %s598
        %v600 = vld [vmem:[%s599] sm:$0xf]
        %s601 = smul.addr %s596, 4
        %s602 = scalar_lea.vmem %s8, %s601
        %v603 = vld [vmem:[%s602] sm:$0xf]
        %v604 = vld [vmem:[#allocation2] sm:$0xff]
        %v605 = vld [vmem:[#allocation2 + $0x8] sm:$0xff]
        %v606 = vld [vmem:[#allocation2 + $0x10] sm:$0xff]
        %v607 = vld [vmem:[#allocation2 + $0x18] sm:$0xff]
        %608 = vxpose.xlu0.c.b16.start [1/8] %v530, 128
        %609 = vxpose.xlu0.c.b16.cont [2/8] 0, 128
        %610 = vxpose.xlu0.c.b16.cont [3/8] 0, 128
        %611 = vxpose.xlu0.c.b16.cont [4/8] 0, 128
        %612 = vxpose.xlu0.c.b16.cont [5/8] 0, 128
        %613 = vxpose.xlu0.c.b16.cont [6/8] 0, 128
        %614 = vxpose.xlu0.c.b16.cont [7/8] 0, 128
        %615 = vxpose.xlu0.c.b16.end [8/8] 0, 128
        %v616 = vpop.trf.xlu0
        %v617 = vpop.trf.xlu0
        %v618 = vpop.trf.xlu0
        %v619 = vpop.trf.xlu0
        %v620 = vpop.trf.xlu0
        %v621 = vpop.trf.xlu0
        %v622 = vpop.trf.xlu0
        %v623 = vpop.trf.xlu0
        %vm624 = vcmask 64512
        %v626 = vsel %vm624, %v616, 0
        %v629 = vsel %vm624, %v617, 0
        %vm631 = vcmask 1043456
        %v633 = vsel %vm631, %v600, 0
        %635 = vmatprep.subr.bf16.mxu0 0
        %636 = vmatpush1.bf16.msra.mxu0 %v633
        %637 = vmatprep.subr.bf16.mxu0 0
        %638 = vmatpush1.bf16.msra.mxu0 0
        %639 = vmatprep.subr.bf16.mxu0 0
        %640 = vmatpush1.bf16.msra.mxu0 0
        %641 = vmatprep.subr.bf16.mxu0 0
        %642 = vmatpush1.bf16.msra.mxu0 0
        %643 = vmatprep.subr.bf16.mxu0 0
        %644 = vmatpush1.bf16.msra.mxu0 0
        %645 = vmatprep.subr.bf16.mxu0 0
        %646 = vmatpush1.bf16.msra.mxu0 0
        %647 = vmatprep.subr.bf16.mxu0 0
        %648 = vmatpush1.bf16.msra.mxu0 0
        %649 = vmatprep.subr.bf16.mxu0 0
        %650 = vmatpush1.bf16.msra.mxu0 0
        %651 = vmatprep.subr.bf16.mxu0 0
        %652 = vmatpush1.bf16.msra.mxu0 0
        %653 = vmatprep.subr.bf16.mxu0 0
        %654 = vmatpush1.bf16.msra.mxu0 0
        %655 = vmatprep.subr.bf16.mxu0 0
        %656 = vmatpush1.bf16.msra.mxu0 0
        %657 = vmatprep.subr.bf16.mxu0 0
        %658 = vmatpush1.bf16.msra.mxu0 0
        %659 = vmatprep.subr.bf16.mxu0 0
        %660 = vmatpush1.bf16.msra.mxu0 0
        %661 = vmatprep.subr.bf16.mxu0 0
        %662 = vmatpush1.bf16.msra.mxu0 0
        %663 = vmatprep.subr.bf16.mxu0 0
        %664 = vmatpush1.bf16.msra.mxu0 0
        %665 = vmatprep.subr.bf16.mxu0 0
        %666 = vmatpush1.bf16.msra.mxu0 0
        %667 = vmatprep.mubr.bf16.mxu0 0
        %668 = vmatmul.mubr.bf16.gmra.mrb[0].mxu0 %v626
        %v669 = vpop.f32.mrb[0].mxu0
        %v670 = vadd.f32 0.0, %v669
        %v671 = vpop.f32.mrb[0].mxu0
        %v672 = vpop.f32.mrb[0].mxu0
        %v673 = vadd.f32 0.0, %v672
        %v674 = vpop.f32.mrb[0].mxu0
        %675 = vmatprep.mubr.bf16.mxu0 0
        %676 = vmatmul.mubr.bf16.gmra.mrb[0].mxu0 %v629
        %v677 = vpop.f32.mrb[0].mxu0
        %v678 = vadd.f32 0.0, %v677
        %v679 = vpop.f32.mrb[0].mxu0
        %v680 = vpop.f32.mrb[0].mxu0
        %v681 = vadd.f32 0.0, %v680
        %v682 = vpop.f32.mrb[0].mxu0
        %683 = vdwg.mxu0
        %v684 = vadd.f32 %v604, %v670
        %v685 = vadd.f32 %v605, %v673
        %v686 = vadd.f32 %v606, %v678
        %v687 = vadd.f32 %v607, %v681
        %vm688 = vcmask 31744
        %689 = vst.msk [vmem:[#allocation2] sm:$0xff] %vm688, %v684
        %690 = vst.msk [vmem:[#allocation2 + $0x8] sm:$0xff] %vm688, %v685
        %691 = vst.msk [vmem:[#allocation2 + $0x10] sm:$0xff] %vm688, %v686
        %692 = vst.msk [vmem:[#allocation2 + $0x18] sm:$0xff] %vm688, %v687
        %v693 = vld [vmem:[#allocation3] sm:$0xf]
        %694 = vxpose.xlu0.c.b16.start [1/8] %v603, 128
        %695 = vxpose.xlu0.c.b16.cont [2/8] 0, 128
        %696 = vxpose.xlu0.c.b16.cont [3/8] 0, 128
        %697 = vxpose.xlu0.c.b16.cont [4/8] 0, 128
        %698 = vxpose.xlu0.c.b16.cont [5/8] 0, 128
        %699 = vxpose.xlu0.c.b16.cont [6/8] 0, 128
        %700 = vxpose.xlu0.c.b16.cont [7/8] 0, 128
        %701 = vxpose.xlu0.c.b16.end [8/8] 0, 128
        %v702 = vpop.trf.xlu0
        %v703 = vpop.trf.xlu0
        %v704 = vpop.trf.xlu0
        %v705 = vpop.trf.xlu0
        %v706 = vpop.trf.xlu0
        %v707 = vpop.trf.xlu0
        %v708 = vpop.trf.xlu0
        %v709 = vpop.trf.xlu0
        %v711 = vsel %vm624, %v702, 0
        %v714 = vsel %vm631, %v594, 0
        %716 = vmatprep.subr.bf16.mxu0 0
        %717 = vmatpush1.bf16.msra.mxu0 %v714
        %718 = vmatprep.subr.bf16.mxu0 0
        %719 = vmatpush1.bf16.msra.mxu0 0
        %720 = vmatprep.subr.bf16.mxu0 0
        %721 = vmatpush1.bf16.msra.mxu0 0
        %722 = vmatprep.subr.bf16.mxu0 0
        %723 = vmatpush1.bf16.msra.mxu0 0
        %724 = vmatprep.subr.bf16.mxu0 0
        %725 = vmatpush1.bf16.msra.mxu0 0
        %726 = vmatprep.subr.bf16.mxu0 0
        %727 = vmatpush1.bf16.msra.mxu0 0
        %728 = vmatprep.subr.bf16.mxu0 0
        %729 = vmatpush1.bf16.msra.mxu0 0
        %730 = vmatprep.subr.bf16.mxu0 0
        %731 = vmatpush1.bf16.msra.mxu0 0
        %732 = vmatprep.subr.bf16.mxu0 0
        %733 = vmatpush1.bf16.msra.mxu0 0
        %734 = vmatprep.subr.bf16.mxu0 0
        %735 = vmatpush1.bf16.msra.mxu0 0
        %736 = vmatprep.subr.bf16.mxu0 0
        %737 = vmatpush1.bf16.msra.mxu0 0
        %738 = vmatprep.subr.bf16.mxu0 0
        %739 = vmatpush1.bf16.msra.mxu0 0
        %740 = vmatprep.subr.bf16.mxu0 0
        %741 = vmatpush1.bf16.msra.mxu0 0
        %742 = vmatprep.subr.bf16.mxu0 0
        %743 = vmatpush1.bf16.msra.mxu0 0
        %744 = vmatprep.subr.bf16.mxu0 0
        %745 = vmatpush1.bf16.msra.mxu0 0
        %746 = vmatprep.subr.bf16.mxu0 0
        %747 = vmatpush1.bf16.msra.mxu0 0
        %748 = vmatprep.mubr.bf16.mxu0 0
        %749 = vmatmul.mubr.bf16.gmra.mrb[0].mxu0 %v711
        %v750 = vpop.f32.mrb[0].mxu0
        %v751 = vadd.f32 0.0, %v750
        %v752 = vpop.f32.mrb[0].mxu0
        %v753 = vpop.f32.mrb[0].mxu0
        %v754 = vpop.f32.mrb[0].mxu0
        %755 = vdwg.mxu0
        %v756 = vadd.f32 %v693, %v751
        %vm757 = vcmask 257024
        %758 = vst.msk [vmem:[#allocation3] sm:$0xf] %vm757, %v756
        // Predicated region
        $region69: #{tpu_custom_call.1} parent=55 // pred_check
          %p759 = pneg %p419
        $region70: #{tpu_custom_call.1} parent=55 // pred_check_branch
          %761 = sbr.rel (%p759) target = $region72
        $region71: #{tpu_custom_call.1} parent=55 // pred_region
          %v762 = vld [vmem:[#allocation2] sm:$0xff]
          %v763 = vld [vmem:[#allocation2 + $0x8] sm:$0xff]
          %v764 = vld [vmem:[#allocation2 + $0x10] sm:$0xff]
          %v765 = vld [vmem:[#allocation2 + $0x18] sm:$0xff]
          %v766 = vmul.f32 %v762, 0.35355338
          %v767 = vmul.f32 %v763, 0.35355338
          %v768 = vmul.f32 %v764, 0.35355338
          %v769 = vmul.f32 %v765, 0.35355338
          %v770 = vpack.c.bf16 %v767, %v766
          %v771 = vpack.c.bf16 %v769, %v768
          %v774 = vunpack.c.l.b16 %v770
          %v775 = vunpack.c.h.b16 %v770
          %v776 = vunpack.c.l.b16 %v771
          %v777 = vunpack.c.h.b16 %v771
          %v778 = vpack.c.b16 %v774, %v774
          %v779 = vpack.c.b16 %v775, %v775
          %v780 = vpack.c.b16 %v776, %v776
          %v781 = vpack.c.b16 %v777, %v777
          %vm786 = vcmask 27648
          %787 = vst.msk [vmem:[%s417] sm:$0xf] %vm786, %v778
          %788 = vst.msk [vmem:[%s417 + $0x4] sm:$0xf] %vm786, %v779
          %789 = vst.msk [vmem:[%s417 + $0x8] sm:$0xf] %vm786, %v780
          %790 = vst.msk [vmem:[%s417 + $0xc] sm:$0xf] %vm786, %v781
          %v791 = vld [vmem:[#allocation3] sm:$0xf]
          %v792 = vpack.c.bf16 %v791, %v791
          %vm793 = vcmask 254976
          %794 = vst.msk [vmem:[%s412] sm:$0x3] %vm793, %v792
        $region72: #{tpu_custom_call.1} parent=55 // pred_fallthru
          _
        %p795 = scmp.lt.s32.totalorder %s33, 1
        %s796 = scalar_select %p795, %s33, 1
        %s797 = smul.addr %s796, 4
        %s798 = smul.addr %s797, 4
        %s799 = scalar_lea.vmem %s9, %s798
        %s800 = sand.u32 %s271, 1
        %s801 = scalar_lea.sflag [#allocation6], %s800
        %s802 = sand.u32 %s271, 1
        %s803 = smul.addr %s802, 2
        %s804 = scalar_lea.vmem [#allocation9], %s803
        // Predicated region
        $region73: #{tpu_custom_call.1} parent=55 // pred_check
          %p805 = pneg %p255
        $region74: #{tpu_custom_call.1} parent=55 // pred_check_branch
          %807 = sbr.rel (%p805) target = $region76
        $region75: #{tpu_custom_call.1} parent=55 // pred_region
          _
        $region76: #{tpu_custom_call.1} parent=55 // pred_fallthru
          _
        // Predicated region
        $region77: #{tpu_custom_call.1} parent=55 // pred_check
          %p808 = pneg %p281
        $region78: #{tpu_custom_call.1} parent=55 // pred_check_branch
          %810 = sbr.rel (%p808) target = $region80
        $region79: #{tpu_custom_call.1} parent=55 // pred_region
          %s812 = ssub.s32 32, 32
          %813 = vsyncadd %s801, %s812
          %s814 = smul.addr %s33, 32
          %s815 = scalar_lea.hbm %s10, %s814
          %s817 = sshll.u32 %s804, 4
          %s818 = int_to_ptr.vmem [resolvable:$true] %s817
          %820 = dma.vmem_to_hbm [thread:$0]  %s818, 32, %s815, %s801
        $region80: #{tpu_custom_call.1} parent=55 // pred_fallthru
          _
      $region56: #{tpu_custom_call.1} parent=5 // pred_fallthru
        _
      %p821 = scmp.le.s32.totalorder 2, %s24
      // Predicated region
      $region81: #{tpu_custom_call.1} parent=5 // pred_check
        %p822 = pneg %p821
      $region82: #{tpu_custom_call.1} parent=5 // pred_check_branch
        %824 = sbr.rel (%p822) target = $region84
      $region83: #{tpu_custom_call.1} parent=5 // pred_region
        %s825 = ssub.s32 %s24, 2
        // Predicated region
        $region85: #{tpu_custom_call.1} parent=83 // pred_check
          %p826 = pneg %p261
        $region86: #{tpu_custom_call.1} parent=83 // pred_check_branch
          %828 = sbr.rel (%p826) target = $region88
        $region87: #{tpu_custom_call.1} parent=83 // pred_region
          %p829 = scmp.lt.s32.totalorder %s35, 1
          %s830 = scalar_select %p829, %s35, 1
          %s831 = smul.addr %s830, 4
          %s832 = smul.addr %s831, 4
          %s833 = scalar_lea.vmem %s9, %s832
        $region88: #{tpu_custom_call.1} parent=83 // pred_fallthru
          _
        // Predicated region
        $region89: #{tpu_custom_call.1} parent=83 // pred_check
          %p834 = pneg %p287
        $region90: #{tpu_custom_call.1} parent=83 // pred_check_branch
          %836 = sbr.rel (%p834) target = $region92
        $region91: #{tpu_custom_call.1} parent=83 // pred_region
          %s837 = sand.u32 %s272, 1
          %s838 = scalar_lea.sflag [#allocation6], %s837
          %s839 = sand.u32 %s272, 1
          %s840 = smul.addr %s839, 2
          %s841 = scalar_lea.vmem [#allocation9], %s840
          %842 = dma.done %s838, 32
        $region92: #{tpu_custom_call.1} parent=83 // pred_fallthru
          _
      $region84: #{tpu_custom_call.1} parent=5 // pred_fallthru
        _
    $region6: #{tpu_custom_call.1} parent=1 // loop_footer
      %s28 = sadd.s32 1, %s24
    $region7: #{tpu_custom_call.1} parent=1 // loop_footer_branch
      %23 = sbr.rel target = $region3
    $region8: #{tpu_custom_call.1} parent=1 // loop_exit
      _
    %843 = vsyncpa [#allocation5], 1
    %s844 = scalar_lea.sflag [#allocation5], 1
    %845 = vsyncpa %s844, 1
    %846 = vsyncpa [#allocation8], 1
    %847 = vsyncpa [#allocation6], 1
    %s848 = scalar_lea.sflag [#allocation6], 1
    %849 = vsyncpa %s848, 1

</llo_original>
